<compile_context>
chip_gen: v5e
topology: v5e:2x2
jax: 0.10.0
libtpu: 0.0.40
codegen_flags: <defaults>
</compile_context>

<pallas_src>
import jax
import jax.numpy as jnp
from jax.experimental import pallas as pl
from jax.experimental.pallas import tpu as pltpu


def _normalize_kernel(x_ref, mean_ref, inv_std_ref, o_ref):
    # Fused: narrow->f32 cast + (x - mean) * (1/std).  No divide (VALU only,
    # EUP never becomes the binding slot); mean/inv_std broadcast over lanes.
    x = x_ref[...].astype(jnp.float32)
    o_ref[...] = (x - mean_ref[...]) * inv_std_ref[...]


def base_module_forward(x, mean, std, *, normalize=True):
    """JAX/Pallas equivalent of BaseModule.forward's normalization.

    x    : (B, C, H, W) any float/int dtype (cast to f32 inside the kernel)
    mean : (C,) per-channel mean
    std  : (C,) per-channel std (entries == 0 are treated as 1, matching
           set_normalization_params)
    """
    if not normalize:
        # BaseModule skips normalization when self.normalize is falsy.
        # TODO(synk): forward() then returns NotImplementedError (abstract);
        # we return the float-cast input as the meaningful tensor result.
        return x.astype(jnp.float32)

    B, C, H, W = x.shape
    rows = B * C
    lanes = H * W

    # --- tiny (C,)-sized prep on the wrapper side ------------------------------
    std_f = std.astype(jnp.float32)
    std_adj = jnp.where(std_f == 0.0, jnp.float32(1.0), std_f)   # std==0 -> 1.0
    inv_std_c = 1.0 / std_adj
    mean_c = mean.astype(jnp.float32)

    mean_rows = jnp.broadcast_to(mean_c[None, :], (B, C)).reshape(rows, 1)
    inv_rows = jnp.broadcast_to(inv_std_c[None, :], (B, C)).reshape(rows, 1)

    # x keeps its native dtype; reshape is layout-free for contiguous NCHW.
    x2 = x.reshape(rows, lanes)

    # --- tiling ----------------------------------------------------------------
    # Lane-axis tiling only for very large spatial extents (keeps each block
    # ~2 MiB and inside v7x's tighter VMEM budget).
    MAX_LANE_BLOCK = 16384
    if lanes > MAX_LANE_BLOCK and lanes % 128 == 0:
        lane_tile = MAX_LANE_BLOCK
        while lane_tile > 128 and lanes % lane_tile != 0:
            lane_tile //= 2
        if lanes % lane_tile != 0:
            lane_tile = lanes
    else:
        # TODO(synk): if H*W is huge and not a multiple of 128 the block stays
        # full-width (masked stores); pad the lane dim for lane-dense stores.
        lane_tile = lanes
    grid_lanes = lanes // lane_tile

    # Row tile: target ~2 MiB of f32 output per block, multiple of 8 sublanes.
    TARGET_BLOCK_BYTES = 2 * 1024 * 1024
    rt = max(8, (TARGET_BLOCK_BYTES // (lane_tile * 4)) // 8 * 8)
    rows_pad8 = ((rows + 7) // 8) * 8
    rt = min(rt, rows_pad8)
    # Prefer >= 2 row blocks when there would otherwise be a grid of 1, so both
    # v7x TensorCores get work (no-op / harmless on v5e & v6e).
    if rt >= rows_pad8 and rows_pad8 >= 16 and grid_lanes == 1:
        rt = ((rows_pad8 // 2 + 7) // 8) * 8

    grid_rows = pl.cdiv(rows, rt)
    rows_pad = grid_rows * rt
    if rows_pad != rows:
        pad = rows_pad - rows
        x2 = jnp.pad(x2, ((0, pad), (0, 0)))
        mean_rows = jnp.pad(mean_rows, ((0, pad), (0, 0)))
        inv_rows = jnp.pad(inv_rows, ((0, pad), (0, 0)), constant_values=1.0)

    out = pl.pallas_call(
        _normalize_kernel,
        out_shape=jax.ShapeDtypeStruct((rows_pad, lanes), jnp.float32),
        grid=(grid_rows, grid_lanes),
        in_specs=[
            pl.BlockSpec((rt, lane_tile), lambda i, j: (i, j)),
            pl.BlockSpec((rt, 1), lambda i, j: (i, 0)),
            pl.BlockSpec((rt, 1), lambda i, j: (i, 0)),
        ],
        out_specs=pl.BlockSpec((rt, lane_tile), lambda i, j: (i, j)),
        compiler_params=pltpu.CompilerParams(
            dimension_semantics=("parallel", "parallel"),
            vmem_limit_bytes=32 * 1024 * 1024,
        ),
    )(x2, mean_rows, inv_rows)

    if rows_pad != rows:
        out = out[:rows]
    return out.reshape(B, C, H, W)


if __name__ == "__main__":
    key = jax.random.PRNGKey(0)
    kx, km, ks = jax.random.split(key, 3)

    B, C, H, W = 2, 4, 16, 16
    x = jax.random.normal(kx, (B, C, H, W), dtype=jnp.float32)
    mean = jax.random.normal(km, (C,), dtype=jnp.float32)
    # Include a zero std entry to exercise the std==0 -> 1.0 rule.
    std = jnp.abs(jax.random.normal(ks, (C,), dtype=jnp.float32)).at[1].set(0.0)

    out = base_module_forward(x, mean, std, normalize=True)
    out = jax.block_until_ready(out)

    # Reference check in plain JAX (matches the PyTorch (x - mean) / std path).
    std_ref = jnp.where(std == 0.0, 1.0, std)
    ref = (x - mean[None, :, None, None]) / std_ref[None, :, None, None]
    assert out.shape == (B, C, H, W)
    assert out.dtype == jnp.float32
    assert jnp.allclose(out, ref, atol=1e-5, rtol=1e-5)

    # Second case: bf16 input (cast fused inside the kernel), multi-block grid.
    xb = jax.random.normal(kx, (4, 4, 32, 32), dtype=jnp.bfloat16)
    out_b = jax.block_until_ready(base_module_forward(xb, mean, std))
    ref_b = (xb.astype(jnp.float32) - mean[None, :, None, None]) / std_ref[
        None, :, None, None
    ]
    assert out_b.dtype == jnp.float32
    assert jnp.allclose(out_b, ref_b, atol=1e-4, rtol=1e-4)

    print("KERNEL_OK")
</pallas_src>

<mosaic_0001>
module attributes {stable_mosaic.version = 11 : i64} {
  func.func @_normalize_kernel(%arg0: i32, %arg1: i32, %arg2: memref<8x256xf32, #tpu.memory_space<vmem>>, %arg3: memref<8x1xf32, #tpu.memory_space<vmem>>, %arg4: memref<8x1xf32, #tpu.memory_space<vmem>>, %arg5: memref<8x256xf32, #tpu.memory_space<vmem>>) attributes {dimension_semantics = [#tpu.dimension_semantics<parallel>, #tpu.dimension_semantics<parallel>], iteration_bounds = array<i64: 1, 1>, scalar_prefetch = 0 : i64, scratch_operands = 0 : i64, tpu.core_type = #tpu.core_type<tc>, window_params = [{transform_indices = @transform_0, window_bounds = array<i64: 8, 256>}, {transform_indices = @transform_1, window_bounds = array<i64: 8, 1>}, {transform_indices = @transform_2, window_bounds = array<i64: 8, 1>}, {transform_indices = @transform_3, window_bounds = array<i64: 8, 256>}]} {
    %c0 = arith.constant 0 : index
    %c0_0 = arith.constant 0 : index
    %0 = vector.load %arg2[%c0, %c0_0] : memref<8x256xf32, #tpu.memory_space<vmem>>, vector<8x256xf32>
    %c0_1 = arith.constant 0 : index
    %c0_2 = arith.constant 0 : index
    %1 = vector.load %arg3[%c0_1, %c0_2] : memref<8x1xf32, #tpu.memory_space<vmem>>, vector<8x1xf32>
    %2 = vector.broadcast %1 : vector<8x1xf32> to vector<8x256xf32>
    %3 = arith.subf %0, %2 : vector<8x256xf32>
    %c0_3 = arith.constant 0 : index
    %c0_4 = arith.constant 0 : index
    %4 = vector.load %arg4[%c0_3, %c0_4] : memref<8x1xf32, #tpu.memory_space<vmem>>, vector<8x1xf32>
    %5 = vector.broadcast %4 : vector<8x1xf32> to vector<8x256xf32>
    %6 = arith.mulf %3, %5 : vector<8x256xf32>
    %c0_5 = arith.constant 0 : index
    %c0_6 = arith.constant 0 : index
    %7 = vector.load %arg5[%c0_5, %c0_6] : memref<8x256xf32, #tpu.memory_space<vmem>>, vector<8x256xf32>
    tpu.vector_store %arg5[%c0_5, %c0_6], %6 {strides = array<i32>} : memref<8x256xf32, #tpu.memory_space<vmem>>, vector<8x256xf32>,
    return
  }
  func.func @transform_0(%arg0: i32, %arg1: i32) -> (i32, i32) {
    %c0_i32 = arith.constant 0 : i32
    return %arg0, %arg1 : i32, i32
  }
  func.func @transform_1(%arg0: i32, %arg1: i32) -> (i32, i32) {
    %c0_i32 = arith.constant 0 : i32
    %c0_i32_0 = arith.constant 0 : i32
    return %arg0, %c0_i32 : i32, i32
  }
  func.func @transform_2(%arg0: i32, %arg1: i32) -> (i32, i32) {
    %c0_i32 = arith.constant 0 : i32
    %c0_i32_0 = arith.constant 0 : i32
    return %arg0, %c0_i32 : i32, i32
  }
  func.func @transform_3(%arg0: i32, %arg1: i32) -> (i32, i32) {
    %c0_i32 = arith.constant 0 : i32
    return %arg0, %arg1 : i32, i32
  }
}

</mosaic_0001>

<llo_original>
// kernel: tpu_custom_call.1
$region0: #{tpu_custom_call.1}
  #allocation0 [shape = 'u32[]', space=smem, size = 0x4, offset = 0x4, fixed_abs, tag = 'smem constant byte address 0x4 - core index']
  #allocation1 [shape = 'u32[72,128]{1,0:T(1,128)}', space=vmem, size = 0x9000, scoped, tag = 'internal scratch']
  %s0 = inlined_call_operand.vmem [shape: f32[8,256], index: 0, kind: input, shape index: {}]
  %s1 = inlined_call_operand.vmem [shape: f32[8,1], index: 1, kind: input, shape index: {}]
  %s2 = inlined_call_operand.vmem [shape: f32[8,1], index: 2, kind: input, shape index: {}]
  %s3 = inlined_call_operand.hbm [shape: f32[8,256], index: 3, kind: output, shape index: {}]
  %s4 = sld [smem:[#allocation0]]
  $region22: #{tpu_custom_call.1} parent=0
    _
  %s6 = ssub.s32 1, %s4
  %s7 = scalar_select 0, %s6, %s4
  $region1: #{tpu_custom_call.1} parent=0
    #allocation2 [shape = 'u8[8192]{0}', space=vmem, size = 0x2000, scoped, tag = 'output window, operand 0, single buffered']
    #allocation3 [shape = 's32[1]{0}', space=sflag, size = 0x4, scoped, tag = 'scoped memory for tpu_custom_call.1']
    %8 = vsyncpa [#allocation3], 0
    // Predicated region
    $region2: #{tpu_custom_call.1} parent=1 // pred_check
      _
    $region3: #{tpu_custom_call.1} parent=1 // pred_check_branch
      %10 = sbr.rel (0) target = $region5
    $region4: #{tpu_custom_call.1} parent=1 // pred_region
      _
    $region5: #{tpu_custom_call.1} parent=1 // pred_fallthru
      _
    // Predicated region
    $region6: #{tpu_custom_call.1} parent=1 // pred_check
      _
    $region7: #{tpu_custom_call.1} parent=1 // pred_check_branch
      %12 = sbr.rel (0) target = $region9
    $region8: #{tpu_custom_call.1} parent=1 // pred_region
      _
    $region9: #{tpu_custom_call.1} parent=1 // pred_fallthru
      _
    // Predicated region
    $region10: #{tpu_custom_call.1} parent=1 // pred_check
      _
    $region11: #{tpu_custom_call.1} parent=1 // pred_check_branch
      %14 = sbr.rel (0) target = $region13
    $region12: #{tpu_custom_call.1} parent=1 // pred_region
      _
    $region13: #{tpu_custom_call.1} parent=1 // pred_fallthru
      _
    %v15 = vld [vmem:[%s0] sm:$0xff]
    %v16 = vld [vmem:[%s0 + $0x8] sm:$0xff]
    %v17 = vld [vmem:[%s1] sm:$0xff]
    %19 = vset.pattern.permute.xlu0 0
    %20 = vperm.xlu0 %19, %v17
    %v21 = vpop.permute.xlu0 %20
    %v23 = vsub.f32 %v15, %v21
    %v24 = vsub.f32 %v16, %v21
    %v25 = vld [vmem:[%s2] sm:$0xff]
    %27 = vset.pattern.permute.xlu0 0
    %28 = vperm.xlu0 %27, %v25
    %v29 = vpop.permute.xlu0 %28
    %v31 = vmul.f32 %v23, %v29
    %v32 = vmul.f32 %v24, %v29
    %33 = vst [vmem:[#allocation2] sm:$0xff] %v31
    %34 = vst [vmem:[#allocation2 + $0x8] sm:$0xff] %v32
    // Predicated region
    $region14: #{tpu_custom_call.1} parent=1 // pred_check
      _
    $region15: #{tpu_custom_call.1} parent=1 // pred_check_branch
      %36 = sbr.rel (0) target = $region17
    $region16: #{tpu_custom_call.1} parent=1 // pred_region
      %38 = vsyncadd [#allocation3], 0
      %s40 = sshll.u32 [#allocation2], 4
      %s41 = int_to_ptr.vmem [resolvable:$true] %s40
      %s42 = sshll.u32 %s3, 4
      %s43 = int_to_ptr.hbm [resolvable:$true] %s42
      %45 = dma.vmem_to_hbm [thread:$0]  %s41, 256, %s43, [#allocation3]
    $region17: #{tpu_custom_call.1} parent=1 // pred_fallthru
      _
    // Predicated region
    $region18: #{tpu_custom_call.1} parent=1 // pred_check
      _
    $region19: #{tpu_custom_call.1} parent=1 // pred_check_branch
      %47 = sbr.rel (0) target = $region21
    $region20: #{tpu_custom_call.1} parent=1 // pred_region
      %49 = dma.done [#allocation3], 256
    $region21: #{tpu_custom_call.1} parent=1 // pred_fallthru
      _
    %50 = vsyncpa [#allocation3], 1

</llo_original>
